<compile_context>
chip_gen: v7x
topology: tpu7x:2x2x1
jax: 0.10.0
libtpu: 0.0.40
codegen_flags: <defaults>
</compile_context>

<pallas_src>
import functools
import math

import numpy as np
import jax
import jax.numpy as jnp
from jax import lax
from jax.experimental import pallas as pl
from jax.experimental.pallas import tpu as pltpu


def edbb_kernel(x_ref, w_ref, b_ref, a_ref, o_ref, *, h):
    """3x3 conv (stride 1, pad 1) + bias + PReLU on a (B_blk*H, W*Cin) row slab.

    x_ref : (M, W*Cin)        input rows, channels fastest on lanes (M = B_blk*H)
    w_ref : (3, W*Cin, WCp)   banded weights, one slice per vertical tap kh
    b_ref : (1, WCp)          bias tiled across W (f32)
    a_ref : (1, WCp)          PReLU slope tiled across W (f32)
    o_ref : (M, WCp)          lane-dense output slab
    """
    m = x_ref.shape[0]

    x = x_ref[...]
    # One matmul per vertical tap; each already produces the lane-dense slab.
    f0 = jnp.dot(x, w_ref[0], preferred_element_type=jnp.float32)  # needs row oh-1
    f1 = jnp.dot(x, w_ref[1], preferred_element_type=jnp.float32)  # needs row oh
    f2 = jnp.dot(x, w_ref[2], preferred_element_type=jnp.float32)  # needs row oh+1

    # Vertical taps: y[oh] = f1[oh] + f0[oh-1] + f2[oh+1], zero rows at the image
    # borders.  Shifts are sublane rolls (XLU); masks keep rows from leaking
    # across the images packed into this block.
    row = lax.broadcasted_iota(jnp.int32, (m, 1), 0)
    oh = row % h
    f0_dn = pltpu.roll(f0, shift=1, axis=0)        # f0_dn[r] = f0[r-1]
    f2_up = pltpu.roll(f2, shift=m - 1, axis=0)    # f2_up[r] = f2[r+1]
    y = f1 + jnp.where(oh != 0, f0_dn, 0.0) + jnp.where(oh != h - 1, f2_up, 0.0)

    # f32 epilogue: bias + PReLU on full 128-lane vregs, unmasked store.
    y = y + b_ref[...]
    alpha = a_ref[...]
    y = jnp.where(y > 0, y, alpha * y)
    o_ref[...] = y.astype(o_ref.dtype)


def edbb_deploy(x_nchw, weight, bias, prelu_alpha, *, compute_dtype=jnp.bfloat16):
    """Matches EDBB_deploy.forward: PReLU(Conv2d(x, 3x3, stride 1, pad 1, bias))."""
    n, cin, h, w = x_nchw.shape
    cout = weight.shape[0]

    # Pad Cout so W*Cout_p is a multiple of 128 -> unmasked full-lane stores.
    lane = 128
    step = lane // math.gcd(w, lane)
    cout_p = -(-cout // step) * step
    wcp = w * cout_p

    # NCHW -> (N*H, W*Cin): one image row per matmul row, channels fastest on lanes.
    # TODO(synk): keep activations in this NHWC-flat layout end-to-end to drop this
    # transpose and the output transpose (each is a full HBM round trip).
    x_rows = jnp.transpose(x_nchw, (0, 2, 3, 1)).reshape(n * h, w * cin)
    x_rows = x_rows.astype(compute_dtype)

    # Banded RHS, one slice per vertical tap kh:
    #   band[kh, iw*Cin + ci, ow*Cout_p + co] = weight[co, ci, kh, iw - ow + 1]
    # (entries with kw = iw-ow+1 outside [0,3) are zero -> implicit horizontal pad).
    w_hwio = jnp.transpose(weight, (2, 3, 1, 0))                          # (3,3,Cin,Cout)
    w_hwio = jnp.pad(w_hwio, ((0, 0), (0, 0), (0, 0), (0, cout_p - cout)))
    sel = np.zeros((3, w, w), np.float32)                                 # sel[kw, iw, ow]
    for kw in range(3):
        for ow in range(w):
            iw = ow + kw - 1
            if 0 <= iw < w:
                sel[kw, iw, ow] = 1.0
    band = jnp.einsum("kio,hkcf->hicof", jnp.asarray(sel), w_hwio)        # (3,W,Cin,W,Cout_p)
    band = band.reshape(3, w * cin, wcp).astype(compute_dtype)

    b_tiled = jnp.tile(jnp.pad(bias, (0, cout_p - cout)), w).reshape(1, wcp).astype(jnp.float32)
    a_tiled = jnp.tile(jnp.pad(prelu_alpha, (0, cout_p - cout)), w).reshape(1, wcp).astype(jnp.float32)

    # Several batch elements per grid step to amortize fixed per-step overhead.
    b_blk = min(n, 8)
    while n % b_blk:
        b_blk -= 1
    m_blk = b_blk * h

    out_rows = pl.pallas_call(
        functools.partial(edbb_kernel, h=h),
        out_shape=jax.ShapeDtypeStruct((n * h, wcp), x_nchw.dtype),
        grid_spec=pltpu.PrefetchScalarGridSpec(
            num_scalar_prefetch=0,
            grid=(n // b_blk,),
            in_specs=[
                pl.BlockSpec((m_blk, w * cin), lambda i: (i, 0)),
                pl.BlockSpec((3, w * cin, wcp), lambda i: (0, 0, 0)),
                pl.BlockSpec((1, wcp), lambda i: (0, 0)),
                pl.BlockSpec((1, wcp), lambda i: (0, 0)),
            ],
            out_specs=pl.BlockSpec((m_blk, wcp), lambda i: (i, 0)),
        ),
        compiler_params=pltpu.CompilerParams(
            dimension_semantics=("parallel",),
        ),
    )(x_rows, band, b_tiled, a_tiled)

    # (N*H, W*Cout_p) -> (N, H, W, Cout) -> NCHW (PyTorch convention).
    out = out_rows.reshape(n, h, w, cout_p)[..., :cout]
    return jnp.transpose(out, (0, 3, 1, 2))


def _reference(x_nchw, weight, bias, prelu_alpha, compute_dtype):
    """Pure-JAX reference mirroring the kernel's compute precision
    (operands rounded to compute_dtype, f32 accumulation)."""
    xq = x_nchw.astype(compute_dtype).astype(jnp.float32)
    wq = weight.astype(compute_dtype).astype(jnp.float32)
    y = lax.conv_general_dilated(
        xq, wq, window_strides=(1, 1), padding=((1, 1), (1, 1)),
        dimension_numbers=("NCHW", "OIHW", "NCHW"),
        precision=lax.Precision.HIGHEST,
    )
    y = y + bias.reshape(1, -1, 1, 1)
    a = prelu_alpha.reshape(1, -1, 1, 1)
    return jnp.where(y > 0, y, a * y)


if __name__ == "__main__":
    key = jax.random.PRNGKey(0)
    k_x, k_w, k_b, k_a = jax.random.split(key, 4)

    N, Cin, Cout, H, W = 2, 4, 8, 16, 16

    x = jax.random.normal(k_x, (N, Cin, H, W), dtype=jnp.float32)
    weight = jax.random.normal(k_w, (Cout, Cin, 3, 3), dtype=jnp.float32) * 0.1
    bias = jax.random.normal(k_b, (Cout,), dtype=jnp.float32) * 0.1
    # PyTorch PReLU default init is 0.25; perturb slightly but deterministically.
    prelu_alpha = 0.25 + 0.01 * jax.random.normal(k_a, (Cout,), dtype=jnp.float32)

    out = edbb_deploy(x, weight, bias, prelu_alpha)
    out = jax.block_until_ready(out)

    ref = _reference(x, weight, bias, prelu_alpha, jnp.bfloat16)
    assert out.shape == (N, Cout, H, W)
    max_err = jnp.max(jnp.abs(out - ref))
    assert jnp.allclose(out, ref, atol=2e-3, rtol=2e-3), f"mismatch vs reference (max err {max_err})"

    print("KERNEL_OK")
</pallas_src>

<mosaic_0001>
module attributes {stable_mosaic.version = 11 : i64} {
  func.func @edbb_kernel(%arg0: i32, %arg1: memref<32x64xbf16, #tpu.memory_space<vmem>>, %arg2: memref<3x64x128xbf16, #tpu.memory_space<vmem>>, %arg3: memref<1x128xf32, #tpu.memory_space<vmem>>, %arg4: memref<1x128xf32, #tpu.memory_space<vmem>>, %arg5: memref<32x128xf32, #tpu.memory_space<vmem>>) attributes {dimension_semantics = [#tpu.dimension_semantics<parallel>], iteration_bounds = array<i64: 1>, scalar_prefetch = 0 : i64, scratch_operands = 0 : i64, tpu.core_type = #tpu.core_type<tc>, window_params = [{transform_indices = @transform_0, window_bounds = array<i64: 32, 64>}, {pipeline_mode = #tpu.pipeline_mode<synchronous>, transform_indices = @transform_1, window_bounds = array<i64: 3, 64, 128>}, {pipeline_mode = #tpu.pipeline_mode<synchronous>, transform_indices = @transform_2, window_bounds = array<i64: 1, 128>}, {pipeline_mode = #tpu.pipeline_mode<synchronous>, transform_indices = @transform_3, window_bounds = array<i64: 1, 128>}, {transform_indices = @transform_4, window_bounds = array<i64: 32, 128>}]} {
    %c0 = arith.constant 0 : index
    %c0_0 = arith.constant 0 : index
    %0 = vector.load %arg1[%c0, %c0_0] : memref<32x64xbf16, #tpu.memory_space<vmem>>, vector<32x64xbf16>
    %c0_1 = arith.constant 0 : index
    %c0_2 = arith.constant 0 : index
    %c0_3 = arith.constant 0 : index
    %1 = vector.load %arg2[%c0_1, %c0_2, %c0_3] : memref<3x64x128xbf16, #tpu.memory_space<vmem>>, vector<1x64x128xbf16>
    %2 = vector.shape_cast %1 : vector<1x64x128xbf16> to vector<64x128xbf16>
    %cst = arith.constant dense<0.000000e+00> : vector<32x128xf32>
    %3 = tpu.matmul %0, %2, %cst {dimension_numbers = #tpu.dot_dimension_numbers<[1], [0], [0], [1], [0, 0, 1, 1], [], []>} : vector<32x64xbf16>, vector<64x128xbf16>, vector<32x128xf32> -> vector<32x128xf32>
    %c1 = arith.constant 1 : index
    %c0_4 = arith.constant 0 : index
    %c0_5 = arith.constant 0 : index
    %4 = vector.load %arg2[%c1, %c0_4, %c0_5] : memref<3x64x128xbf16, #tpu.memory_space<vmem>>, vector<1x64x128xbf16>
    %5 = vector.shape_cast %4 : vector<1x64x128xbf16> to vector<64x128xbf16>
    %cst_6 = arith.constant dense<0.000000e+00> : vector<32x128xf32>
    %6 = tpu.matmul %0, %5, %cst_6 {dimension_numbers = #tpu.dot_dimension_numbers<[1], [0], [0], [1], [0, 0, 1, 1], [], []>} : vector<32x64xbf16>, vector<64x128xbf16>, vector<32x128xf32> -> vector<32x128xf32>
    %c2 = arith.constant 2 : index
    %c0_7 = arith.constant 0 : index
    %c0_8 = arith.constant 0 : index
    %7 = vector.load %arg2[%c2, %c0_7, %c0_8] : memref<3x64x128xbf16, #tpu.memory_space<vmem>>, vector<1x64x128xbf16>
    %8 = vector.shape_cast %7 : vector<1x64x128xbf16> to vector<64x128xbf16>
    %cst_9 = arith.constant dense<0.000000e+00> : vector<32x128xf32>
    %9 = tpu.matmul %0, %8, %cst_9 {dimension_numbers = #tpu.dot_dimension_numbers<[1], [0], [0], [1], [0, 0, 1, 1], [], []>} : vector<32x64xbf16>, vector<64x128xbf16>, vector<32x128xf32> -> vector<32x128xf32>
    %10 = tpu.iota {dimensions = array<i32: 0>} : vector<32x1xi32>
    %c16_i32 = arith.constant 16 : i32
    %c0_i32 = arith.constant 0 : i32
    %11 = arith.cmpi eq, %c16_i32, %c0_i32 : i32
    %c1_i32 = arith.constant 1 : i32
    %12 = arith.select %11, %c1_i32, %c16_i32 : i32
    %13 = vector.broadcast %12 : i32 to vector<32x1xi32>
    %14 = arith.remsi %10, %13 : vector<32x1xi32>
    %c0_i32_10 = arith.constant 0 : i32
    %15 = vector.broadcast %c0_i32_10 : i32 to vector<32x1xi32>
    %16 = arith.cmpi ne, %14, %15 : vector<32x1xi32>
    %c0_i32_11 = arith.constant 0 : i32
    %17 = vector.broadcast %c0_i32_11 : i32 to vector<32x1xi32>
    %18 = arith.cmpi slt, %14, %17 : vector<32x1xi32>
    %c0_i32_12 = arith.constant 0 : i32
    %19 = arith.cmpi slt, %12, %c0_i32_12 : i32
    %20 = vector.broadcast %19 : i1 to vector<32x1xi1>
    %21 = vector.broadcast %20 : vector<32x1xi1> to vector<32x1xi1>
    %22 = arith.xori %18, %21 : vector<32x1xi1>
    %23 = arith.andi %22, %16 : vector<32x1xi1>
    %24 = vector.broadcast %12 : i32 to vector<32x1xi32>
    %25 = arith.addi %14, %24 : vector<32x1xi32>
    %26 = arith.select %23, %25, %14 : vector<32x1xi1>, vector<32x1xi32>
    %c1_i32_13 = arith.constant 1 : i32
    %27 = tpu.dynamic_rotate %3 by %c1_i32_13 dim 0 : vector<32x128xf32>, i32 -> vector<32x128xf32>
    %c31_i32 = arith.constant 31 : i32
    %28 = tpu.dynamic_rotate %9 by %c31_i32 dim 0 : vector<32x128xf32>, i32 -> vector<32x128xf32>
    %c0_i32_14 = arith.constant 0 : i32
    %29 = vector.broadcast %c0_i32_14 : i32 to vector<32x1xi32>
    %30 = arith.cmpi ne, %26, %29 : vector<32x1xi32>
    %cst_15 = arith.constant 0.000000e+00 : f32
    %31 = vector.shape_cast %30 : vector<32x1xi1> to vector<32x1xi1>
    %32 = vector.broadcast %31 : vector<32x1xi1> to vector<32x128xi1>
    %33 = vector.broadcast %cst_15 : f32 to vector<32x128xf32>
    %34 = arith.select %32, %27, %33 : vector<32x128xi1>, vector<32x128xf32>
    %35 = arith.addf %6, %34 : vector<32x128xf32>
    %c15_i32 = arith.constant 15 : i32
    %36 = vector.broadcast %c15_i32 : i32 to vector<32x1xi32>
    %37 = arith.cmpi ne, %26, %36 : vector<32x1xi32>
    %cst_16 = arith.constant 0.000000e+00 : f32
    %38 = vector.shape_cast %37 : vector<32x1xi1> to vector<32x1xi1>
    %39 = vector.broadcast %38 : vector<32x1xi1> to vector<32x128xi1>
    %40 = vector.broadcast %cst_16 : f32 to vector<32x128xf32>
    %41 = arith.select %39, %28, %40 : vector<32x128xi1>, vector<32x128xf32>
    %42 = arith.addf %35, %41 : vector<32x128xf32>
    %c0_17 = arith.constant 0 : index
    %c0_18 = arith.constant 0 : index
    %43 = vector.load %arg3[%c0_17, %c0_18] : memref<1x128xf32, #tpu.memory_space<vmem>>, vector<1x128xf32>
    %44 = vector.broadcast %43 : vector<1x128xf32> to vector<32x128xf32>
    %45 = arith.addf %42, %44 : vector<32x128xf32>
    %c0_19 = arith.constant 0 : index
    %c0_20 = arith.constant 0 : index
    %46 = vector.load %arg4[%c0_19, %c0_20] : memref<1x128xf32, #tpu.memory_space<vmem>>, vector<1x128xf32>
    %cst_21 = arith.constant 0.000000e+00 : f32
    %47 = vector.broadcast %cst_21 : f32 to vector<32x128xf32>
    %48 = arith.cmpf ogt, %45, %47 : vector<32x128xf32>
    %49 = vector.broadcast %46 : vector<1x128xf32> to vector<32x128xf32>
    %50 = arith.mulf %49, %45 : vector<32x128xf32>
    %51 = arith.select %48, %45, %50 : vector<32x128xi1>, vector<32x128xf32>
    %c0_22 = arith.constant 0 : index
    %c0_23 = arith.constant 0 : index
    %52 = vector.load %arg5[%c0_22, %c0_23] : memref<32x128xf32, #tpu.memory_space<vmem>>, vector<32x128xf32>
    tpu.vector_store %arg5[%c0_22, %c0_23], %51 {strides = array<i32>} : memref<32x128xf32, #tpu.memory_space<vmem>>, vector<32x128xf32>,
    return
  }
  func.func @transform_0(%arg0: i32) -> (i32, i32) {
    %c0_i32 = arith.constant 0 : i32
    %c0_i32_0 = arith.constant 0 : i32
    return %arg0, %c0_i32 : i32, i32
  }
  func.func @transform_1(%arg0: i32) -> (i32, i32, i32) {
    %c0_i32 = arith.constant 0 : i32
    %c0_i32_0 = arith.constant 0 : i32
    %c0_i32_1 = arith.constant 0 : i32
    %c0_i32_2 = arith.constant 0 : i32
    return %c0_i32, %c0_i32_0, %c0_i32_1 : i32, i32, i32
  }
  func.func @transform_2(%arg0: i32) -> (i32, i32) {
    %c0_i32 = arith.constant 0 : i32
    %c0_i32_0 = arith.constant 0 : i32
    %c0_i32_1 = arith.constant 0 : i32
    return %c0_i32, %c0_i32_0 : i32, i32
  }
  func.func @transform_3(%arg0: i32) -> (i32, i32) {
    %c0_i32 = arith.constant 0 : i32
    %c0_i32_0 = arith.constant 0 : i32
    %c0_i32_1 = arith.constant 0 : i32
    return %c0_i32, %c0_i32_0 : i32, i32
  }
  func.func @transform_4(%arg0: i32) -> (i32, i32) {
    %c0_i32 = arith.constant 0 : i32
    %c0_i32_0 = arith.constant 0 : i32
    return %arg0, %c0_i32 : i32, i32
  }
}

</mosaic_0001>

<llo_original>
// kernel: tpu_custom_call.1
$region0: #{tpu_custom_call.1}
  #allocation0 [shape = 'u32[]', space=smem, size = 0x4, offset = 0x4, fixed_abs, tag = 'smem constant byte address 0x4 - core index']
  #allocation1 [shape = 'u32[144,128]{1,0:T(1,128)}', space=vmem, size = 0x12000, scoped, tag = 'internal scratch']
  %s0 = inlined_call_operand.hbm [shape: bf16[32,64], index: 0, kind: input, shape index: {}]
  %s1 = inlined_call_operand.hbm [shape: bf16[3,64,128], index: 1, kind: input, shape index: {}]
  %s2 = inlined_call_operand.vmem [shape: f32[1,128], index: 2, kind: input, shape index: {}]
  %s3 = inlined_call_operand.vmem [shape: f32[1,128], index: 3, kind: input, shape index: {}]
  %s4 = inlined_call_operand.hbm [shape: f32[32,128], index: 4, kind: output, shape index: {}]
  %s5 = sld [smem:[#allocation0]]
  $region34: #{tpu_custom_call.1} parent=0
    _
  %s7 = ssub.s32 1, %s5
  %s8 = scalar_select 0, %s7, %s5
  $region1: #{tpu_custom_call.1} parent=0
    #allocation2 [shape = 'u8[8192]{0}', space=vmem, size = 0x2000, scoped, tag = 'input window, operand 0, single buffered']
    #allocation3 [shape = 's32[1]{0}', space=sflag, size = 0x4, scoped, tag = 'scoped memory for tpu_custom_call.1']
    #allocation4 [shape = 's32[1]{0}', space=sflag, size = 0x4, scoped, tag = 'scoped memory for tpu_custom_call.1']
    #allocation5 [shape = 'u8[49152]{0}', space=vmem, size = 0xc000, scoped, tag = 'input window, operand 1, single buffered']
    #allocation6 [shape = 's32[1]{0}', space=sflag, size = 0x4, scoped, tag = 'scoped memory for tpu_custom_call.1']
    #allocation7 [shape = 'u8[16384]{0}', space=vmem, size = 0x4000, scoped, tag = 'output window, operand 0, single buffered']
    %9 = vsyncpa [#allocation3], 0
    %10 = vsyncpa [#allocation6], 0
    %11 = vsyncpa [#allocation4], 0
    // Predicated region
    $region2: #{tpu_custom_call.1} parent=1 // pred_check
      _
    $region3: #{tpu_custom_call.1} parent=1 // pred_check_branch
      %13 = sbr.rel (0) target = $region5
    $region4: #{tpu_custom_call.1} parent=1 // pred_region
      %s15 = ssub.s32 256, 256
      %16 = vsyncadd [#allocation3], %s15
      %s17 = sshll.u32 [#allocation2], 4
      %s18 = int_to_ptr.vmem [resolvable:$true] %s17
      %23 = dma.hbm_to_vmem [thread:$0]  %s0, 256, %s18, [#allocation3], 64, 64, 4
    $region5: #{tpu_custom_call.1} parent=1 // pred_fallthru
      _
    // Predicated region
    $region6: #{tpu_custom_call.1} parent=1 // pred_check
      _
    $region7: #{tpu_custom_call.1} parent=1 // pred_check_branch
      %25 = sbr.rel (0) target = $region9
    $region8: #{tpu_custom_call.1} parent=1 // pred_region
      %s27 = ssub.s32 1536, 1536
      %28 = vsyncadd [#allocation6], %s27
      %s29 = sshll.u32 [#allocation5], 4
      %s30 = int_to_ptr.vmem [resolvable:$true] %s29
      %35 = dma.hbm_to_vmem [thread:$0]  %s1, 1536, %s30, [#allocation6], 64, 64, 4
    $region9: #{tpu_custom_call.1} parent=1 // pred_fallthru
      _
    // Predicated region
    $region10: #{tpu_custom_call.1} parent=1 // pred_check
      _
    $region11: #{tpu_custom_call.1} parent=1 // pred_check_branch
      %37 = sbr.rel (0) target = $region13
    $region12: #{tpu_custom_call.1} parent=1 // pred_region
      _
    $region13: #{tpu_custom_call.1} parent=1 // pred_fallthru
      _
    // Predicated region
    $region14: #{tpu_custom_call.1} parent=1 // pred_check
      _
    $region15: #{tpu_custom_call.1} parent=1 // pred_check_branch
      %39 = sbr.rel (0) target = $region17
    $region16: #{tpu_custom_call.1} parent=1 // pred_region
      _
    $region17: #{tpu_custom_call.1} parent=1 // pred_fallthru
      _
    // Predicated region
    $region18: #{tpu_custom_call.1} parent=1 // pred_check
      _
    $region19: #{tpu_custom_call.1} parent=1 // pred_check_branch
      %41 = sbr.rel (0) target = $region21
    $region20: #{tpu_custom_call.1} parent=1 // pred_region
      %42 = dma.done [#allocation3], 256
    $region21: #{tpu_custom_call.1} parent=1 // pred_fallthru
      _
    // Predicated region
    $region22: #{tpu_custom_call.1} parent=1 // pred_check
      _
    $region23: #{tpu_custom_call.1} parent=1 // pred_check_branch
      %44 = sbr.rel (0) target = $region25
    $region24: #{tpu_custom_call.1} parent=1 // pred_region
      %45 = dma.done [#allocation6], 1536
    $region25: #{tpu_custom_call.1} parent=1 // pred_fallthru
      _
    %v47 = vld [vmem:[#allocation2] sm:$0xf]
    %v48 = vld [vmem:[#allocation2 + $0x4] sm:$0xf]
    %v49 = vld [vmem:[#allocation2 + $0x8] sm:$0xf]
    %v50 = vld [vmem:[#allocation2 + $0xc] sm:$0xf]
    %v51 = vld [vmem:[#allocation5] sm:$0xf]
    %v52 = vld [vmem:[#allocation5 + $0x4] sm:$0xf]
    %v53 = vld [vmem:[#allocation5 + $0x8] sm:$0xf]
    %v54 = vld [vmem:[#allocation5 + $0xc] sm:$0xf]
    %v55 = vld [vmem:[#allocation5 + $0x10] sm:$0xf]
    %v56 = vld [vmem:[#allocation5 + $0x14] sm:$0xf]
    %v57 = vld [vmem:[#allocation5 + $0x18] sm:$0xf]
    %v58 = vld [vmem:[#allocation5 + $0x1c] sm:$0xf]
    %v63 = vunpack.c.l.b16 %v47
    %v64 = vunpack.c.l.b16 %v48
    %v65 = vunpack.c.l.b16 %v49
    %v66 = vunpack.c.l.b16 %v50
    %v67 = vpack.c.b16 %v64, %v63
    %v68 = vpack.c.b16 %v66, %v65
    %v77 = vunpack.c.l.b16 %v51
    %v78 = vunpack.c.l.b16 %v52
    %v79 = vunpack.c.l.b16 %v53
    %v80 = vunpack.c.l.b16 %v54
    %v81 = vunpack.c.l.b16 %v55
    %v82 = vunpack.c.l.b16 %v56
    %v83 = vunpack.c.l.b16 %v57
    %v84 = vunpack.c.l.b16 %v58
    %v85 = vpack.c.b16 %v78, %v77
    %v86 = vpack.c.b16 %v80, %v79
    %v87 = vpack.c.b16 %v82, %v81
    %v88 = vpack.c.b16 %v84, %v83
    %vm93 = vcmask 523264
    %v95 = vsel %vm93, %v67, 0
    %v98 = vsel %vm93, %v68, 0
    %100 = vmatprep.subr.bf16.mxu0 0
    %101 = vmatpush1.bf16.msra.mxu0 %v85
    %102 = vmatprep.subr.bf16.mxu0 0
    %103 = vmatpush1.bf16.msra.mxu0 %v86
    %104 = vmatprep.subr.bf16.mxu0 0
    %105 = vmatpush1.bf16.msra.mxu0 %v87
    %106 = vmatprep.subr.bf16.mxu0 0
    %107 = vmatpush1.bf16.msra.mxu0 %v88
    %108 = vmatprep.subr.bf16.mxu0 0
    %109 = vmatpush1.bf16.msra.mxu0 0
    %110 = vmatprep.subr.bf16.mxu0 0
    %111 = vmatpush1.bf16.msra.mxu0 0
    %112 = vmatprep.subr.bf16.mxu0 0
    %113 = vmatpush1.bf16.msra.mxu0 0
    %114 = vmatprep.subr.bf16.mxu0 0
    %115 = vmatpush1.bf16.msra.mxu0 0
    %116 = vmatprep.subr.bf16.mxu0 0
    %117 = vmatpush1.bf16.msra.mxu0 0
    %118 = vmatprep.subr.bf16.mxu0 0
    %119 = vmatpush1.bf16.msra.mxu0 0
    %120 = vmatprep.subr.bf16.mxu0 0
    %121 = vmatpush1.bf16.msra.mxu0 0
    %122 = vmatprep.subr.bf16.mxu0 0
    %123 = vmatpush1.bf16.msra.mxu0 0
    %124 = vmatprep.subr.bf16.mxu0 0
    %125 = vmatpush1.bf16.msra.mxu0 0
    %126 = vmatprep.subr.bf16.mxu0 0
    %127 = vmatpush1.bf16.msra.mxu0 0
    %128 = vmatprep.subr.bf16.mxu0 0
    %129 = vmatpush1.bf16.msra.mxu0 0
    %130 = vmatprep.subr.bf16.mxu0 0
    %131 = vmatpush1.bf16.msra.mxu0 0
    %132 = vmatprep.mubr.bf16.mxu0 0
    %133 = vmatmul.mubr.bf16.gmra.mrb[0].mxu0 %v95
    %v134 = vpop.f32.mrb[0].mxu0
    %v135 = vadd.f32 0.0, %v134
    %v136 = vpop.f32.mrb[0].mxu0
    %v137 = vpop.f32.mrb[0].mxu0
    %v138 = vadd.f32 0.0, %v137
    %v139 = vpop.f32.mrb[0].mxu0
    %140 = vmatprep.mubr.bf16.mxu0 0
    %141 = vmatmul.mubr.bf16.gmra.mrb[0].mxu0 %v98
    %v142 = vpop.f32.mrb[0].mxu0
    %v143 = vadd.f32 0.0, %v142
    %v144 = vpop.f32.mrb[0].mxu0
    %v145 = vpop.f32.mrb[0].mxu0
    %v146 = vadd.f32 0.0, %v145
    %v147 = vpop.f32.mrb[0].mxu0
    %148 = vdwg.mxu0
    %s149 = scalar_lea.vmem [#allocation5], 32
    %v150 = vld [vmem:[%s149] sm:$0xf]
    %v151 = vld [vmem:[%s149 + $0x4] sm:$0xf]
    %v152 = vld [vmem:[%s149 + $0x8] sm:$0xf]
    %v153 = vld [vmem:[%s149 + $0xc] sm:$0xf]
    %v154 = vld [vmem:[%s149 + $0x10] sm:$0xf]
    %v155 = vld [vmem:[%s149 + $0x14] sm:$0xf]
    %v156 = vld [vmem:[%s149 + $0x18] sm:$0xf]
    %v157 = vld [vmem:[%s149 + $0x1c] sm:$0xf]
    %s158 = scalar_lea.vmem [#allocation5], 64
    %v159 = vld [vmem:[%s158] sm:$0xf]
    %v160 = vld [vmem:[%s158 + $0x4] sm:$0xf]
    %v161 = vld [vmem:[%s158 + $0x8] sm:$0xf]
    %v162 = vld [vmem:[%s158 + $0xc] sm:$0xf]
    %v163 = vld [vmem:[%s158 + $0x10] sm:$0xf]
    %v164 = vld [vmem:[%s158 + $0x14] sm:$0xf]
    %v165 = vld [vmem:[%s158 + $0x18] sm:$0xf]
    %v166 = vld [vmem:[%s158 + $0x1c] sm:$0xf]
    %v175 = vunpack.c.l.b16 %v159
    %v176 = vunpack.c.l.b16 %v160
    %v177 = vunpack.c.l.b16 %v161
    %v178 = vunpack.c.l.b16 %v162
    %v179 = vunpack.c.l.b16 %v163
    %v180 = vunpack.c.l.b16 %v164
    %v181 = vunpack.c.l.b16 %v165
    %v182 = vunpack.c.l.b16 %v166
    %v183 = vpack.c.b16 %v176, %v175
    %v184 = vpack.c.b16 %v178, %v177
    %v185 = vpack.c.b16 %v180, %v179
    %v186 = vpack.c.b16 %v182, %v181
    %191 = vmatprep.subr.bf16.mxu0 0
    %192 = vmatpush1.bf16.msra.mxu0 %v183
    %193 = vmatprep.subr.bf16.mxu0 0
    %194 = vmatpush1.bf16.msra.mxu0 %v184
    %195 = vmatprep.subr.bf16.mxu0 0
    %196 = vmatpush1.bf16.msra.mxu0 %v185
    %197 = vmatprep.subr.bf16.mxu0 0
    %198 = vmatpush1.bf16.msra.mxu0 %v186
    %199 = vmatprep.subr.bf16.mxu0 0
    %200 = vmatpush1.bf16.msra.mxu0 0
    %201 = vmatprep.subr.bf16.mxu0 0
    %202 = vmatpush1.bf16.msra.mxu0 0
    %203 = vmatprep.subr.bf16.mxu0 0
    %204 = vmatpush1.bf16.msra.mxu0 0
    %205 = vmatprep.subr.bf16.mxu0 0
    %206 = vmatpush1.bf16.msra.mxu0 0
    %207 = vmatprep.subr.bf16.mxu0 0
    %208 = vmatpush1.bf16.msra.mxu0 0
    %209 = vmatprep.subr.bf16.mxu0 0
    %210 = vmatpush1.bf16.msra.mxu0 0
    %211 = vmatprep.subr.bf16.mxu0 0
    %212 = vmatpush1.bf16.msra.mxu0 0
    %213 = vmatprep.subr.bf16.mxu0 0
    %214 = vmatpush1.bf16.msra.mxu0 0
    %215 = vmatprep.subr.bf16.mxu0 0
    %216 = vmatpush1.bf16.msra.mxu0 0
    %217 = vmatprep.subr.bf16.mxu0 0
    %218 = vmatpush1.bf16.msra.mxu0 0
    %219 = vmatprep.subr.bf16.mxu0 0
    %220 = vmatpush1.bf16.msra.mxu0 0
    %221 = vmatprep.subr.bf16.mxu0 0
    %222 = vmatpush1.bf16.msra.mxu0 0
    %223 = vmatprep.mubr.bf16.mxu0 0
    %224 = vmatmul.mubr.bf16.gmra.mrb[0].mxu0 %v95
    %v225 = vpop.f32.mrb[0].mxu0
    %v226 = vadd.f32 0.0, %v225
    %v227 = vpop.f32.mrb[0].mxu0
    %v228 = vpop.f32.mrb[0].mxu0
    %v229 = vadd.f32 0.0, %v228
    %v230 = vpop.f32.mrb[0].mxu0
    %231 = vmatprep.mubr.bf16.mxu0 0
    %232 = vmatmul.mubr.bf16.gmra.mrb[0].mxu0 %v98
    %v233 = vpop.f32.mrb[0].mxu0
    %v234 = vadd.f32 0.0, %v233
    %v235 = vpop.f32.mrb[0].mxu0
    %v236 = vpop.f32.mrb[0].mxu0
    %v237 = vadd.f32 0.0, %v236
    %v238 = vpop.f32.mrb[0].mxu0
    %239 = vdwg.mxu0
    %v240 = vlaneseq
    %v241 = vshrl.u32 %v240, 7
    %v242 = vadd.s32 %v241, 8
    %v243 = vadd.s32 %v241, 16
    %v244 = vadd.s32 %v241, 24
    %vm245 = vcmp.lt.s32.totalorder %v241, 0
    %v246 = vsub.s32 0, %v241
    %v247 = vsel %vm245, %v246, %v241
    %v248 = vshrl.u32 %v247, 4
    %v249 = vand.u32 %v247, 15
    %v250 = vsub.s32 0, %v249
    %v251 = vsel %vm245, %v250, %v249
    %vm252 = vcmp.lt.s32.totalorder %v242, 0
    %v253 = vsub.s32 0, %v242
    %v254 = vsel %vm252, %v253, %v242
    %v255 = vshrl.u32 %v254, 4
    %v256 = vand.u32 %v254, 15
    %v257 = vsub.s32 0, %v256
    %v258 = vsel %vm252, %v257, %v256
    %vm259 = vcmp.lt.s32.totalorder %v243, 0
    %v260 = vsub.s32 0, %v243
    %v261 = vsel %vm259, %v260, %v243
    %v262 = vshrl.u32 %v261, 4
    %v263 = vand.u32 %v261, 15
    %v264 = vsub.s32 0, %v263
    %v265 = vsel %vm259, %v264, %v263
    %vm266 = vcmp.lt.s32.totalorder %v244, 0
    %v267 = vsub.s32 0, %v244
    %v268 = vsel %vm266, %v267, %v244
    %v269 = vshrl.u32 %v268, 4
    %v270 = vand.u32 %v268, 15
    %v271 = vsub.s32 0, %v270
    %v272 = vsel %vm266, %v271, %v270
    %vm273 = vcmp.ne.s32.totalorder %v251, 0
    %vm274 = vcmp.ne.s32.totalorder %v258, 0
    %vm275 = vcmp.ne.s32.totalorder %v265, 0
    %vm276 = vcmp.ne.s32.totalorder %v272, 0
    %vm277 = vcmp.lt.s32.totalorder %v251, 0
    %vm278 = vcmp.lt.s32.totalorder %v258, 0
    %vm279 = vcmp.lt.s32.totalorder %v265, 0
    %vm280 = vcmp.lt.s32.totalorder %v272, 0
    %vm281 = vmand %vm277, %vm273
    %vm282 = vmand %vm278, %vm274
    %vm283 = vmand %vm279, %vm275
    %vm284 = vmand %vm280, %vm276
    %v285 = vadd.s32 %v251, 16
    %v286 = vadd.s32 %v258, 16
    %v287 = vadd.s32 %v265, 16
    %v288 = vadd.s32 %v272, 16
    %v289 = vsel %vm281, %v285, %v251
    %v290 = vsel %vm282, %v286, %v258
    %v291 = vsel %vm283, %v287, %v265
    %v292 = vsel %vm284, %v288, %v272
    %v293 = vrot.slane %v135, 7
    %v294 = vrot.slane %v138, 7
    %v295 = vrot.slane %v143, 7
    %v296 = vrot.slane %v146, 7
    %vm297 = vcmp.lt.s32.totalorder %v241, 1
    %v298 = vsel %vm297, %v295, %v296
    %v299 = vsel %vm297, %v294, %v295
    %v300 = vsel %vm297, %v293, %v294
    %v301 = vsel %vm297, %v296, %v293
    %v302 = vrot.slane %v226, 1
    %v303 = vrot.slane %v229, 1
    %v304 = vrot.slane %v234, 1
    %v305 = vrot.slane %v237, 1
    %vm306 = vcmp.lt.s32.totalorder %v241, 7
    %v307 = vsel %vm306, %v304, %v305
    %v308 = vsel %vm306, %v303, %v304
    %v309 = vsel %vm306, %v302, %v303
    %v310 = vsel %vm306, %v305, %v302
    %vm311 = vcmp.ne.s32.totalorder %v289, 0
    %vm312 = vcmp.ne.s32.totalorder %v290, 0
    %vm313 = vcmp.ne.s32.totalorder %v291, 0
    %vm314 = vcmp.ne.s32.totalorder %v292, 0
    %v315 = vsel %vm311, 1, 0
    %v316 = vsel %vm312, 1, 0
    %v317 = vsel %vm313, 1, 0
    %v318 = vsel %vm314, 1, 0
    %vm319 = vcmp.eq.s32.totalorder %v315, 1
    %vm320 = vcmp.eq.s32.totalorder %v316, 1
    %vm321 = vcmp.eq.s32.totalorder %v317, 1
    %vm322 = vcmp.eq.s32.totalorder %v318, 1
    %v323 = vsel %vm319, %v301, 0.0
    %v324 = vsel %vm320, %v300, 0.0
    %v325 = vsel %vm321, %v299, 0.0
    %v326 = vsel %vm322, %v298, 0.0
    %v335 = vunpack.c.l.b16 %v150
    %v336 = vunpack.c.l.b16 %v151
    %v337 = vunpack.c.l.b16 %v152
    %v338 = vunpack.c.l.b16 %v153
    %v339 = vunpack.c.l.b16 %v154
    %v340 = vunpack.c.l.b16 %v155
    %v341 = vunpack.c.l.b16 %v156
    %v342 = vunpack.c.l.b16 %v157
    %v343 = vpack.c.b16 %v336, %v335
    %v344 = vpack.c.b16 %v338, %v337
    %v345 = vpack.c.b16 %v340, %v339
    %v346 = vpack.c.b16 %v342, %v341
    %351 = vmatprep.subr.bf16.mxu0 0
    %352 = vmatpush1.bf16.msra.mxu0 %v343
    %353 = vmatprep.subr.bf16.mxu0 0
    %354 = vmatpush1.bf16.msra.mxu0 %v344
    %355 = vmatprep.subr.bf16.mxu0 0
    %356 = vmatpush1.bf16.msra.mxu0 %v345
    %357 = vmatprep.subr.bf16.mxu0 0
    %358 = vmatpush1.bf16.msra.mxu0 %v346
    %359 = vmatprep.subr.bf16.mxu0 0
    %360 = vmatpush1.bf16.msra.mxu0 0
    %361 = vmatprep.subr.bf16.mxu0 0
    %362 = vmatpush1.bf16.msra.mxu0 0
    %363 = vmatprep.subr.bf16.mxu0 0
    %364 = vmatpush1.bf16.msra.mxu0 0
    %365 = vmatprep.subr.bf16.mxu0 0
    %366 = vmatpush1.bf16.msra.mxu0 0
    %367 = vmatprep.subr.bf16.mxu0 0
    %368 = vmatpush1.bf16.msra.mxu0 0
    %369 = vmatprep.subr.bf16.mxu0 0
    %370 = vmatpush1.bf16.msra.mxu0 0
    %371 = vmatprep.subr.bf16.mxu0 0
    %372 = vmatpush1.bf16.msra.mxu0 0
    %373 = vmatprep.subr.bf16.mxu0 0
    %374 = vmatpush1.bf16.msra.mxu0 0
    %375 = vmatprep.subr.bf16.mxu0 0
    %376 = vmatpush1.bf16.msra.mxu0 0
    %377 = vmatprep.subr.bf16.mxu0 0
    %378 = vmatpush1.bf16.msra.mxu0 0
    %379 = vmatprep.subr.bf16.mxu0 0
    %380 = vmatpush1.bf16.msra.mxu0 0
    %381 = vmatprep.subr.bf16.mxu0 0
    %382 = vmatpush1.bf16.msra.mxu0 0
    %383 = vmatprep.mubr.bf16.mxu0 0
    %384 = vmatmul.mubr.bf16.gmra.mrb[0].mxu0 %v95
    %v385 = vpop.f32.mrb[0].mxu0
    %v386 = vadd.f32 %v323, %v385
    %v387 = vpop.f32.mrb[0].mxu0
    %v388 = vpop.f32.mrb[0].mxu0
    %v389 = vadd.f32 %v324, %v388
    %v390 = vpop.f32.mrb[0].mxu0
    %391 = vmatprep.mubr.bf16.mxu0 0
    %392 = vmatmul.mubr.bf16.gmra.mrb[0].mxu0 %v98
    %v393 = vpop.f32.mrb[0].mxu0
    %v394 = vadd.f32 %v325, %v393
    %v395 = vpop.f32.mrb[0].mxu0
    %v396 = vpop.f32.mrb[0].mxu0
    %v397 = vadd.f32 %v326, %v396
    %v398 = vpop.f32.mrb[0].mxu0
    %399 = vdwg.mxu0
    %vm400 = vcmp.ne.s32.totalorder %v289, 15
    %vm401 = vcmp.ne.s32.totalorder %v290, 15
    %vm402 = vcmp.ne.s32.totalorder %v291, 15
    %vm403 = vcmp.ne.s32.totalorder %v292, 15
    %v404 = vsel %vm400, 1, 0
    %v405 = vsel %vm401, 1, 0
    %v406 = vsel %vm402, 1, 0
    %v407 = vsel %vm403, 1, 0
    %vm408 = vcmp.eq.s32.totalorder %v404, 1
    %vm409 = vcmp.eq.s32.totalorder %v405, 1
    %vm410 = vcmp.eq.s32.totalorder %v406, 1
    %vm411 = vcmp.eq.s32.totalorder %v407, 1
    %v412 = vsel %vm408, %v309, 0.0
    %v413 = vsel %vm409, %v308, 0.0
    %v414 = vsel %vm410, %v307, 0.0
    %v415 = vsel %vm411, %v310, 0.0
    %v416 = vadd.f32 %v386, %v412
    %v417 = vadd.f32 %v389, %v413
    %v418 = vadd.f32 %v394, %v414
    %v419 = vadd.f32 %v397, %v415
    %v420 = vld [vmem:[%s2] sm:$0x1]
    %v422 = vlaneseq
    %v423 = vshrl.u32 %v422, 7
    %v424 = vsub.s32 0, %v423
    %v425 = vrot.slane %v420, %v424
    %v427 = vadd.f32 %v416, %v425
    %v428 = vadd.f32 %v417, %v425
    %v429 = vadd.f32 %v418, %v425
    %v430 = vadd.f32 %v419, %v425
    %v431 = vld [vmem:[%s3] sm:$0x1]
    %vm432 = vcmp.gt.f32.partialorder %v427, 0.0
    %vm433 = vcmp.gt.f32.partialorder %v428, 0.0
    %vm434 = vcmp.gt.f32.partialorder %v429, 0.0
    %vm435 = vcmp.gt.f32.partialorder %v430, 0.0
    %v437 = vlaneseq
    %v438 = vshrl.u32 %v437, 7
    %v439 = vsub.s32 0, %v438
    %v440 = vrot.slane %v431, %v439
    %v442 = vmul.f32 %v440, %v427
    %v443 = vmul.f32 %v440, %v428
    %v444 = vmul.f32 %v440, %v429
    %v445 = vmul.f32 %v440, %v430
    %v446 = vsel %vm432, %v427, %v442
    %v447 = vsel %vm433, %v428, %v443
    %v448 = vsel %vm434, %v429, %v444
    %v449 = vsel %vm435, %v430, %v445
    %450 = vst [vmem:[#allocation7] sm:$0xff] %v446
    %451 = vst [vmem:[#allocation7 + $0x8] sm:$0xff] %v447
    %452 = vst [vmem:[#allocation7 + $0x10] sm:$0xff] %v448
    %453 = vst [vmem:[#allocation7 + $0x18] sm:$0xff] %v449
    // Predicated region
    $region26: #{tpu_custom_call.1} parent=1 // pred_check
      _
    $region27: #{tpu_custom_call.1} parent=1 // pred_check_branch
      %455 = sbr.rel (0) target = $region29
    $region28: #{tpu_custom_call.1} parent=1 // pred_region
      %s457 = ssub.s32 512, 512
      %458 = vsyncadd [#allocation4], %s457
      %s459 = sshll.u32 [#allocation7], 4
      %s460 = int_to_ptr.vmem [resolvable:$true] %s459
      %465 = dma.vmem_to_hbm [thread:$0]  %s460, 512, %s4, [#allocation4], 128, 128, 8
    $region29: #{tpu_custom_call.1} parent=1 // pred_fallthru
      _
    // Predicated region
    $region30: #{tpu_custom_call.1} parent=1 // pred_check
      _
    $region31: #{tpu_custom_call.1} parent=1 // pred_check_branch
      %467 = sbr.rel (0) target = $region33
    $region32: #{tpu_custom_call.1} parent=1 // pred_region
      %468 = dma.done [#allocation4], 512
    $region33: #{tpu_custom_call.1} parent=1 // pred_fallthru
      _
    %469 = vsyncpa [#allocation3], 1
    %470 = vsyncpa [#allocation6], 1
    %471 = vsyncpa [#allocation4], 1

</llo_original>
